<compile_context>
chip_gen: v5e
topology: v5e:2x2
jax: 0.10.0
libtpu: 0.0.40
codegen_flags: <defaults>
</compile_context>

<pallas_src>
import jax
import jax.numpy as jnp
from jax.experimental import pallas as pl
from jax.experimental.pallas import tpu as pltpu

# ----------------------------- problem sizes --------------------------------
B, C_IN, H, W = 2, 4, 16, 16      # input image batch (NCHW)
HW = H * W                        # 256
C_MID = 16                        # encoder conv channels
FEAT = 32                         # encoder.resnet.fc.out_features (stand-in)
H1, H2, NCLS = 512, 128, 10       # MLP head sizes
NCLS_PAD = 128                    # lane-dense padded output width
KH = KW = 3                       # conv kernel
K_IM2COL = KH * KW * C_IN         # 36
PACK = 8                          # im2col rows packed per lane-dense row
ROWS_PACKED = (B * HW) // PACK    # 64
K_PACKED = PACK * K_IM2COL        # 288
CONV_N = PACK * C_MID             # 128  (lane-dense conv output width)
ROWS_PER_IMG = HW // PACK         # 32   (packed rows per image)
BN_EPS = 1e-5


# ------------------------------- kernel -------------------------------------
def enc_classifier_kernel(
    patches_ref,                  # (64, 288)  bf16  packed im2col patches
    cwp_ref,                      # (288, 128) bf16  block-diagonal conv weight
    pool_ref,                     # (B, 64)    bf16  0/1 per-image pooling mask
    w01_ref,                      # (128, 512) bf16  unpack∘(1/HW)∘fcw∘w1 fold
    w2_ref,                       # (512, 128) bf16  (BN1 folded in)
    w3_ref,                       # (128, 128) bf16  (BN2 folded in, zero-padded)
    bias_ref,                     # (8, 512)   f32   packed biases
    out_ref,                      # (B, 128)   f32
):
    # Bias rows read as ref slices (sub-window loads, nothing extra kept live).
    cb = bias_ref[0:1, 0:CONV_N]                             # (1, 128) conv bias, lane-tiled
    b01 = bias_ref[1:2, 0:H1]                                # (1, 512) fcb@w1 + b1
    b2 = bias_ref[2:3, 0:H2]                                 # (1, 128) BN1-folded
    b3 = bias_ref[3:4, 0:NCLS_PAD]                           # (1, 128) BN2-folded, padded

    # ---- encoder conv3x3 (im2col, 8 rows per lane-dense row) -> (64, 128) ---
    conv = jnp.dot(patches_ref[...], cwp_ref[...],
                   preferred_element_type=jnp.float32) + cb
    conv = jnp.maximum(conv, 0.0)

    # ---- global average pool: host-built 0/1 mask (1/HW folded into w01) ----
    pooled = jnp.dot(pool_ref[...], conv.astype(jnp.bfloat16),
                     preferred_element_type=jnp.float32)     # (B, 128) partial sums

    # ---- (un-pack ∘ mean ∘ encoder fc ∘ Linear(FEAT,512)) in one matmul -----
    h = jnp.maximum(jnp.dot(pooled.astype(jnp.bfloat16), w01_ref[...],
                            preferred_element_type=jnp.float32) + b01, 0.0)   # (B, 512)

    # ---- rest of the head (eval-mode BN folded, Dropout = identity) ---------
    h = jnp.maximum(jnp.dot(h.astype(jnp.bfloat16), w2_ref[...],
                            preferred_element_type=jnp.float32) + b2, 0.0)    # (B, 128)
    out_ref[...] = (jnp.dot(h.astype(jnp.bfloat16), w3_ref[...],
                            preferred_element_type=jnp.float32)
                    + b3).astype(out_ref.dtype)                               # (B, 128)


# ------------------------------ host helpers ---------------------------------
def _im2col(x_nchw):
    """NCHW image -> (B*H*W, KH*KW*C_IN) patches (padding=1, stride=1)."""
    x = jnp.transpose(x_nchw, (0, 2, 3, 1))                  # NHWC
    xp = jnp.pad(x, ((0, 0), (1, 1), (1, 1), (0, 0)))
    taps = [xp[:, i:i + H, j:j + W, :] for i in range(KH) for j in range(KW)]
    patches = jnp.stack(taps, axis=3)                        # (B,H,W,9,C_IN)
    return patches.reshape(B * H * W, KH * KW * C_IN)


def _im2col_packed(x_nchw):
    """Lane-dense packing: (B*H*W, 36) -> (64, 8*36) via a contiguous reshape."""
    return _im2col(x_nchw).reshape(ROWS_PACKED, K_PACKED)


def prepare_params(params):
    """Host-side (once): fold eval-mode BN into next Linear (f32), fold the
    encoder fc + 1/HW mean + channel un-pack into the first head Linear, build
    the block-diagonal packed conv weight and the 0/1 pooling mask, pack
    biases, pad the last layer to 128 lanes, cast matmul weights to bf16."""
    (cw, cb, fcw, fcb, w1, b1, s1, t1, w2, b2, s2, t2, w3, b3) = params

    # BatchNorm1d (eval) fold, done in float32:
    #   relu(h)@ (s1*w2) + (t1@w2 + b2)  ==  (relu(h)*s1 + t1) @ w2 + b2
    w2f = s1.reshape(-1, 1) * w2                             # (H1, H2)
    b2f = t1 @ w2 + b2                                       # (1, H2)
    w3f = s2.reshape(-1, 1) * w3                             # (H2, NCLS)
    b3f = t2 @ w3 + b3                                       # (1, NCLS)

    # Pad final layer to a lane-dense 128-wide output (unmasked vst).
    w3p = jnp.zeros((H2, NCLS_PAD), jnp.float32).at[:, :NCLS].set(w3f)
    b3p = jnp.zeros((1, NCLS_PAD), jnp.float32).at[:, :NCLS].set(b3f)

    # Block-diagonal conv weight: 8 copies of cw along the diagonal -> (288,128)
    cwp = jnp.zeros((K_PACKED, CONV_N), jnp.float32)
    for k in range(PACK):
        cwp = cwp.at[k * K_IM2COL:(k + 1) * K_IM2COL,
                     k * C_MID:(k + 1) * C_MID].set(cw)
    cbp = jnp.tile(cb, (1, PACK))                            # (1, 128)

    # Per-image 0/1 pooling mask over packed rows (exact in bf16).
    pool = jnp.zeros((B, ROWS_PACKED), jnp.float32)
    for b in range(B):
        pool = pool.at[b, b * ROWS_PER_IMG:(b + 1) * ROWS_PER_IMG].set(1.0)

    # Encoder fc folded into Linear(FEAT, 512) (no activation in between),
    # then merged with the channel un-pack (8 tiled copies) and the 1/HW mean
    # scale (HW = 256, exact power of two) into one (128, 512) weight.
    w01 = fcw @ w1                                           # (C_MID, H1)
    b01 = fcb @ w1 + b1                                      # (1, H1)
    w01p = jnp.tile(w01, (PACK, 1)) / HW                     # (128, H1)

    # Pack all small biases into one (8, H1) f32 array (one DMA instead of four).
    bias_pack = jnp.zeros((8, H1), jnp.float32)
    bias_pack = bias_pack.at[0, :CONV_N].set(cbp[0])
    bias_pack = bias_pack.at[1, :H1].set(b01[0])
    bias_pack = bias_pack.at[2, :H2].set(b2f[0])
    bias_pack = bias_pack.at[3, :NCLS_PAD].set(b3p[0])

    bf = jnp.bfloat16
    return (cwp.astype(bf), pool.astype(bf), w01p.astype(bf),
            w2f.astype(bf), w3p.astype(bf), bias_pack)


@jax.jit
def enc_classifier_forward(x_nchw, kparams):
    patches = _im2col_packed(x_nchw.astype(jnp.float32)).astype(jnp.bfloat16)
    cwp, pool, w01p, w2f, w3p, bias_pack = kparams
    inputs = (patches, cwp, pool, w01p, w2f, w3p, bias_pack)

    flops = 2 * (ROWS_PACKED * K_PACKED * CONV_N       # packed conv matmul
                 + B * ROWS_PACKED * CONV_N            # pooling matmul
                 + B * CONV_N * H1                     # fused fc+Linear1
                 + B * H1 * H2 + B * H2 * NCLS_PAD)    # Linear2, Linear3
    bytes_accessed = (sum(int(v.size) * v.dtype.itemsize for v in inputs)
                      + B * NCLS_PAD * 4)

    vmem = pl.BlockSpec(memory_space=pltpu.MemorySpace.VMEM)
    out = pl.pallas_call(
        enc_classifier_kernel,
        out_shape=jax.ShapeDtypeStruct((B, NCLS_PAD), jnp.float32),
        in_specs=[vmem] * len(inputs),
        out_specs=vmem,
        cost_estimate=pl.CostEstimate(flops=flops, transcendentals=0,
                                      bytes_accessed=bytes_accessed),
    )(*inputs)
    return out[:, :NCLS]


# --------------------------- deterministic params ----------------------------
def make_params(key):
    ks = jax.random.split(key, 18)

    def dense(k, shape, scale):
        return jax.random.normal(k, shape, jnp.float32) * scale

    cw = dense(ks[0], (K_IM2COL, C_MID), 0.1)
    cb = dense(ks[1], (1, C_MID), 0.1)
    fcw = dense(ks[2], (C_MID, FEAT), 0.1)
    fcb = dense(ks[3], (1, FEAT), 0.1)

    w1 = dense(ks[4], (FEAT, H1), 0.05)
    b1 = dense(ks[5], (1, H1), 0.05)
    w2 = dense(ks[6], (H1, H2), 0.05)
    b2 = dense(ks[7], (1, H2), 0.05)
    w3 = dense(ks[8], (H2, NCLS), 0.05)
    b3 = dense(ks[9], (1, NCLS), 0.05)

    # BatchNorm1d parameters + running stats, folded to affine scale/shift.
    def fold_bn(kg, kb, km, kv, n):
        gamma = 1.0 + 0.1 * jax.random.normal(kg, (1, n), jnp.float32)
        beta = 0.1 * jax.random.normal(kb, (1, n), jnp.float32)
        mean = 0.1 * jax.random.normal(km, (1, n), jnp.float32)
        var = jnp.abs(1.0 + 0.1 * jax.random.normal(kv, (1, n), jnp.float32))
        scale = gamma / jnp.sqrt(var + BN_EPS)
        shift = beta - mean * scale
        return scale, shift

    s1, t1 = fold_bn(ks[10], ks[11], ks[12], ks[13], H1)
    s2, t2 = fold_bn(ks[14], ks[15], ks[16], ks[17], H2)

    return (cw, cb, fcw, fcb, w1, b1, s1, t1, w2, b2, s2, t2, w3, b3)


# ------------------------------ JAX references --------------------------------
def reference_forward(x_nchw, params):
    """Original module math: f32, unfolded BN, mean-pool, separate encoder fc."""
    (cw, cb, fcw, fcb, w1, b1, s1, t1, w2, b2, s2, t2, w3, b3) = params
    patches = _im2col(x_nchw.astype(jnp.float32))
    conv = jnp.maximum(patches @ cw + cb, 0.0)               # (B*HW, C_MID)
    pooled = conv.reshape(B, HW, C_MID).mean(axis=1)
    feat = pooled @ fcw + fcb
    h = jnp.maximum(feat @ w1 + b1, 0.0) * s1 + t1
    h = jnp.maximum(h @ w2 + b2, 0.0) * s2 + t2
    return h @ w3 + b3


def reference_forward_quantized(x_nchw, kparams):
    """Mirrors the kernel math exactly (folded/packed params, bf16 operands)."""
    cwp, pool, w01p, w2f, w3p, bias_pack = kparams
    f32 = lambda a: a.astype(jnp.float32)
    q = lambda a: a.astype(jnp.bfloat16).astype(jnp.float32)
    cb = bias_pack[0:1, :CONV_N]
    b01 = bias_pack[1:2, :H1]
    b2 = bias_pack[2:3, :H2]
    b3 = bias_pack[3:4, :NCLS_PAD]

    patches = q(_im2col_packed(x_nchw.astype(jnp.float32)))
    conv = jnp.maximum(patches @ f32(cwp) + cb, 0.0)          # (64, 128)
    pooled = f32(pool) @ q(conv)                              # (B, 128)
    h = jnp.maximum(q(pooled) @ f32(w01p) + b01, 0.0)
    h = jnp.maximum(q(h) @ f32(w2f) + b2, 0.0)
    return (q(h) @ f32(w3p) + b3)[:, :NCLS]


# ----------------------------------- main -------------------------------------
if __name__ == "__main__":
    key = jax.random.PRNGKey(0)
    kx, kp = jax.random.split(key)
    x = jax.random.normal(kx, (B, C_IN, H, W), jnp.float32)   # NCHW like PyTorch
    params = make_params(kp)
    kparams = prepare_params(params)

    out = enc_classifier_forward(x, kparams)
    out = jax.block_until_ready(out)
    assert out.shape == (B, NCLS), out.shape

    # Tight check against an exact bf16-quantized replica of the kernel math.
    ref_q = reference_forward_quantized(x, kparams)
    if not jnp.allclose(out, ref_q, atol=1e-2, rtol=1e-2):
        raise AssertionError("Pallas output does not match quantized reference")

    # Looser check against the original f32 module semantics (validates BN/fc
    # folds, block-diagonal conv packing, pooling mask and output padding).
    ref = reference_forward(x, params)
    if not jnp.allclose(out, ref, atol=5e-2, rtol=5e-2):
        raise AssertionError("Pallas output does not match f32 module reference")

    print("KERNEL_OK")
</pallas_src>

<mosaic_0001>
module attributes {stable_mosaic.version = 11 : i64} {
  func.func @enc_classifier_kernel(%arg0: memref<64x288xbf16, #tpu.memory_space<vmem>>, %arg1: memref<288x128xbf16, #tpu.memory_space<vmem>>, %arg2: memref<2x64xbf16, #tpu.memory_space<vmem>>, %arg3: memref<128x512xbf16, #tpu.memory_space<vmem>>, %arg4: memref<512x128xbf16, #tpu.memory_space<vmem>>, %arg5: memref<128x128xbf16, #tpu.memory_space<vmem>>, %arg6: memref<8x512xf32, #tpu.memory_space<vmem>>, %arg7: memref<2x128xf32, #tpu.memory_space<vmem>>) attributes {dimension_semantics = [], scalar_prefetch = 0 : i64, scratch_operands = 0 : i64, tpu.core_type = #tpu.core_type<tc>} {
    %c0 = arith.constant 0 : index
    %c0_0 = arith.constant 0 : index
    %0 = vector.load %arg6[%c0, %c0_0] : memref<8x512xf32, #tpu.memory_space<vmem>>, vector<1x128xf32>
    %c1 = arith.constant 1 : index
    %c0_1 = arith.constant 0 : index
    %1 = vector.load %arg6[%c1, %c0_1] : memref<8x512xf32, #tpu.memory_space<vmem>>, vector<1x512xf32>
    %c2 = arith.constant 2 : index
    %c0_2 = arith.constant 0 : index
    %2 = vector.load %arg6[%c2, %c0_2] : memref<8x512xf32, #tpu.memory_space<vmem>>, vector<1x128xf32>
    %c3 = arith.constant 3 : index
    %c0_3 = arith.constant 0 : index
    %3 = vector.load %arg6[%c3, %c0_3] : memref<8x512xf32, #tpu.memory_space<vmem>>, vector<1x128xf32>
    %c0_4 = arith.constant 0 : index
    %c0_5 = arith.constant 0 : index
    %4 = vector.load %arg0[%c0_4, %c0_5] : memref<64x288xbf16, #tpu.memory_space<vmem>>, vector<64x288xbf16>
    %c0_6 = arith.constant 0 : index
    %c0_7 = arith.constant 0 : index
    %5 = vector.load %arg1[%c0_6, %c0_7] : memref<288x128xbf16, #tpu.memory_space<vmem>>, vector<288x128xbf16>
    %cst = arith.constant dense<0.000000e+00> : vector<64x128xf32>
    %6 = tpu.matmul %4, %5, %cst {dimension_numbers = #tpu.dot_dimension_numbers<[1], [0], [0], [1], [0, 0, 1, 1], [], []>} : vector<64x288xbf16>, vector<288x128xbf16>, vector<64x128xf32> -> vector<64x128xf32>
    %7 = vector.broadcast %0 : vector<1x128xf32> to vector<64x128xf32>
    %8 = arith.addf %6, %7 : vector<64x128xf32>
    %cst_8 = arith.constant 0.000000e+00 : f32
    %9 = vector.broadcast %cst_8 : f32 to vector<64x128xf32>
    %10 = arith.maximumf %8, %9 : vector<64x128xf32>
    %c0_9 = arith.constant 0 : index
    %c0_10 = arith.constant 0 : index
    %11 = vector.load %arg2[%c0_9, %c0_10] : memref<2x64xbf16, #tpu.memory_space<vmem>>, vector<2x64xbf16>
    %12 = arith.truncf %10 : vector<64x128xf32> to vector<64x128xbf16>
    %cst_11 = arith.constant dense<0.000000e+00> : vector<2x128xf32>
    %13 = tpu.matmul %11, %12, %cst_11 {dimension_numbers = #tpu.dot_dimension_numbers<[1], [0], [0], [1], [0, 0, 1, 1], [], []>} : vector<2x64xbf16>, vector<64x128xbf16>, vector<2x128xf32> -> vector<2x128xf32>
    %14 = arith.truncf %13 : vector<2x128xf32> to vector<2x128xbf16>
    %c0_12 = arith.constant 0 : index
    %c0_13 = arith.constant 0 : index
    %15 = vector.load %arg3[%c0_12, %c0_13] : memref<128x512xbf16, #tpu.memory_space<vmem>>, vector<128x512xbf16>
    %cst_14 = arith.constant dense<0.000000e+00> : vector<2x512xf32>
    %16 = tpu.matmul %14, %15, %cst_14 {dimension_numbers = #tpu.dot_dimension_numbers<[1], [0], [0], [1], [0, 0, 1, 1], [], []>} : vector<2x128xbf16>, vector<128x512xbf16>, vector<2x512xf32> -> vector<2x512xf32>
    %17 = vector.broadcast %1 : vector<1x512xf32> to vector<2x512xf32>
    %18 = arith.addf %16, %17 : vector<2x512xf32>
    %cst_15 = arith.constant 0.000000e+00 : f32
    %19 = vector.broadcast %cst_15 : f32 to vector<2x512xf32>
    %20 = arith.maximumf %18, %19 : vector<2x512xf32>
    %21 = arith.truncf %20 : vector<2x512xf32> to vector<2x512xbf16>
    %c0_16 = arith.constant 0 : index
    %c0_17 = arith.constant 0 : index
    %22 = vector.load %arg4[%c0_16, %c0_17] : memref<512x128xbf16, #tpu.memory_space<vmem>>, vector<512x128xbf16>
    %cst_18 = arith.constant dense<0.000000e+00> : vector<2x128xf32>
    %23 = tpu.matmul %21, %22, %cst_18 {dimension_numbers = #tpu.dot_dimension_numbers<[1], [0], [0], [1], [0, 0, 1, 1], [], []>} : vector<2x512xbf16>, vector<512x128xbf16>, vector<2x128xf32> -> vector<2x128xf32>
    %24 = vector.broadcast %2 : vector<1x128xf32> to vector<2x128xf32>
    %25 = arith.addf %23, %24 : vector<2x128xf32>
    %cst_19 = arith.constant 0.000000e+00 : f32
    %26 = vector.broadcast %cst_19 : f32 to vector<2x128xf32>
    %27 = arith.maximumf %25, %26 : vector<2x128xf32>
    %28 = arith.truncf %27 : vector<2x128xf32> to vector<2x128xbf16>
    %c0_20 = arith.constant 0 : index
    %c0_21 = arith.constant 0 : index
    %29 = vector.load %arg5[%c0_20, %c0_21] : memref<128x128xbf16, #tpu.memory_space<vmem>>, vector<128x128xbf16>
    %cst_22 = arith.constant dense<0.000000e+00> : vector<2x128xf32>
    %30 = tpu.matmul %28, %29, %cst_22 {dimension_numbers = #tpu.dot_dimension_numbers<[1], [0], [0], [1], [0, 0, 1, 1], [], []>} : vector<2x128xbf16>, vector<128x128xbf16>, vector<2x128xf32> -> vector<2x128xf32>
    %31 = vector.broadcast %3 : vector<1x128xf32> to vector<2x128xf32>
    %32 = arith.addf %30, %31 : vector<2x128xf32>
    %c0_23 = arith.constant 0 : index
    %c0_24 = arith.constant 0 : index
    %33 = vector.load %arg7[%c0_23, %c0_24] : memref<2x128xf32, #tpu.memory_space<vmem>>, vector<2x128xf32>
    tpu.vector_store %arg7[%c0_23, %c0_24], %32 {strides = array<i32>} : memref<2x128xf32, #tpu.memory_space<vmem>>, vector<2x128xf32>,
    return
  }
}

</mosaic_0001>

<llo_original>
// kernel: enc_classifier_forward.1
$region0: #{enc_classifier_forward.1}
  #allocation0 [shape = 'u32[]', space=smem, size = 0x4, offset = 0x4, fixed_abs, tag = 'smem constant byte address 0x4 - core index']
  #allocation1 [shape = 'u32[72,128]{1,0:T(1,128)}', space=vmem, size = 0x9000, scoped, tag = 'internal scratch']
  %s0 = inlined_call_operand.vmem [shape: bf16[64,288], index: 0, kind: input, shape index: {}]
  %s1 = inlined_call_operand.vmem [shape: bf16[288,128], index: 1, kind: input, shape index: {}]
  %s2 = inlined_call_operand.vmem [shape: bf16[2,64], index: 2, kind: input, shape index: {}]
  %s3 = inlined_call_operand.vmem [shape: bf16[128,512], index: 3, kind: input, shape index: {}]
  %s4 = inlined_call_operand.vmem [shape: bf16[512,128], index: 4, kind: input, shape index: {}]
  %s5 = inlined_call_operand.vmem [shape: bf16[128,128], index: 5, kind: input, shape index: {}]
  %s6 = inlined_call_operand.vmem [shape: f32[8,512], index: 6, kind: input, shape index: {}]
  %s7 = inlined_call_operand.hbm [shape: f32[2,128], index: 7, kind: output, shape index: {}]
  %s8 = sld [smem:[#allocation0]]
  $region38: #{enc_classifier_forward.1} parent=0
    _
  %s10 = ssub.s32 1, %s8
  %s11 = scalar_select 0, %s10, %s8
  $region1: #{enc_classifier_forward.1} parent=0
    #allocation2 [shape = 'u8[1024]{0}', space=vmem, size = 0x400, scoped, tag = 'output window, operand 0, single buffered']
    #allocation3 [shape = 's32[1]{0}', space=sflag, size = 0x4, scoped, tag = 'scoped memory for enc_classifier_forward.1']
    %12 = vsyncpa [#allocation3], 0
    // Predicated region
    $region2: #{enc_classifier_forward.1} parent=1 // pred_check
      _
    $region3: #{enc_classifier_forward.1} parent=1 // pred_check_branch
      %14 = sbr.rel (0) target = $region5
    $region4: #{enc_classifier_forward.1} parent=1 // pred_region
      _
    $region5: #{enc_classifier_forward.1} parent=1 // pred_fallthru
      _
    // Predicated region
    $region6: #{enc_classifier_forward.1} parent=1 // pred_check
      _
    $region7: #{enc_classifier_forward.1} parent=1 // pred_check_branch
      %16 = sbr.rel (0) target = $region9
    $region8: #{enc_classifier_forward.1} parent=1 // pred_region
      _
    $region9: #{enc_classifier_forward.1} parent=1 // pred_fallthru
      _
    // Predicated region
    $region10: #{enc_classifier_forward.1} parent=1 // pred_check
      _
    $region11: #{enc_classifier_forward.1} parent=1 // pred_check_branch
      %18 = sbr.rel (0) target = $region13
    $region12: #{enc_classifier_forward.1} parent=1 // pred_region
      _
    $region13: #{enc_classifier_forward.1} parent=1 // pred_fallthru
      _
    // Predicated region
    $region14: #{enc_classifier_forward.1} parent=1 // pred_check
      _
    $region15: #{enc_classifier_forward.1} parent=1 // pred_check_branch
      %20 = sbr.rel (0) target = $region17
    $region16: #{enc_classifier_forward.1} parent=1 // pred_region
      _
    $region17: #{enc_classifier_forward.1} parent=1 // pred_fallthru
      _
    // Predicated region
    $region18: #{enc_classifier_forward.1} parent=1 // pred_check
      _
    $region19: #{enc_classifier_forward.1} parent=1 // pred_check_branch
      %22 = sbr.rel (0) target = $region21
    $region20: #{enc_classifier_forward.1} parent=1 // pred_region
      _
    $region21: #{enc_classifier_forward.1} parent=1 // pred_fallthru
      _
    // Predicated region
    $region22: #{enc_classifier_forward.1} parent=1 // pred_check
      _
    $region23: #{enc_classifier_forward.1} parent=1 // pred_check_branch
      %24 = sbr.rel (0) target = $region25
    $region24: #{enc_classifier_forward.1} parent=1 // pred_region
      _
    $region25: #{enc_classifier_forward.1} parent=1 // pred_fallthru
      _
    // Predicated region
    $region26: #{enc_classifier_forward.1} parent=1 // pred_check
      _
    $region27: #{enc_classifier_forward.1} parent=1 // pred_check_branch
      %26 = sbr.rel (0) target = $region29
    $region28: #{enc_classifier_forward.1} parent=1 // pred_region
      _
    $region29: #{enc_classifier_forward.1} parent=1 // pred_fallthru
      _
    %v28 = vld [vmem:[%s6] ss:$0 sm:$0xff]
    %s29 = scalar_lea.vmem %s6, 1
    %v30 = vld [vmem:[%s29] ss:$8 sm:$0xf]
    %v31 = vld [vmem:[%s6 + $0x2] ss:$0 sm:$0xff]
    %v32 = vld [vmem:[%s6 + $0x3] ss:$0 sm:$0xff]
    %v33 = vld [vmem:[%s0] sm:$0xff]
    %v34 = vld [vmem:[%s0 + $0x8] sm:$0xf]
    %v35 = vld [vmem:[%s0 + $0xc] sm:$0xff]
    %v36 = vld [vmem:[%s0 + $0x14] sm:$0xf]
    %v37 = vld [vmem:[%s0 + $0x18] sm:$0xff]
    %v38 = vld [vmem:[%s0 + $0x20] sm:$0xf]
    %v39 = vld [vmem:[%s0 + $0x24] sm:$0xff]
    %v40 = vld [vmem:[%s0 + $0x2c] sm:$0xf]
    %v41 = vld [vmem:[%s0 + $0x30] sm:$0xff]
    %v42 = vld [vmem:[%s0 + $0x38] sm:$0xf]
    %v43 = vld [vmem:[%s0 + $0x3c] sm:$0xff]
    %v44 = vld [vmem:[%s0 + $0x44] sm:$0xf]
    %v45 = vld [vmem:[%s0 + $0x48] sm:$0xff]
    %v46 = vld [vmem:[%s0 + $0x50] sm:$0xf]
    %v47 = vld [vmem:[%s0 + $0x54] sm:$0xff]
    %v48 = vld [vmem:[%s0 + $0x5c] sm:$0xf]
    %v49 = vld [vmem:[%s1] sm:$0xf]
    %v50 = vld [vmem:[%s1 + $0x4] sm:$0xf]
    %v51 = vld [vmem:[%s1 + $0x8] sm:$0xf]
    %v52 = vld [vmem:[%s1 + $0xc] sm:$0xf]
    %v53 = vld [vmem:[%s1 + $0x10] sm:$0xf]
    %v54 = vld [vmem:[%s1 + $0x14] sm:$0xf]
    %v55 = vld [vmem:[%s1 + $0x18] sm:$0xf]
    %v56 = vld [vmem:[%s1 + $0x1c] sm:$0xf]
    %v57 = vld [vmem:[%s1 + $0x20] sm:$0xf]
    %v58 = vld [vmem:[%s1 + $0x24] sm:$0xf]
    %v59 = vld [vmem:[%s1 + $0x28] sm:$0xf]
    %v60 = vld [vmem:[%s1 + $0x2c] sm:$0xf]
    %v61 = vld [vmem:[%s1 + $0x30] sm:$0xf]
    %v62 = vld [vmem:[%s1 + $0x34] sm:$0xf]
    %v63 = vld [vmem:[%s1 + $0x38] sm:$0xf]
    %v64 = vld [vmem:[%s1 + $0x3c] sm:$0xf]
    %v65 = vld [vmem:[%s1 + $0x40] sm:$0xf]
    %v66 = vld [vmem:[%s1 + $0x44] sm:$0xf]
    %v67 = vld [vmem:[%s1 + $0x48] sm:$0xf]
    %v68 = vld [vmem:[%s1 + $0x4c] sm:$0xf]
    %v69 = vld [vmem:[%s1 + $0x50] sm:$0xf]
    %v70 = vld [vmem:[%s1 + $0x54] sm:$0xf]
    %v71 = vld [vmem:[%s1 + $0x58] sm:$0xf]
    %v72 = vld [vmem:[%s1 + $0x5c] sm:$0xf]
    %v73 = vld [vmem:[%s1 + $0x60] sm:$0xf]
    %v74 = vld [vmem:[%s1 + $0x64] sm:$0xf]
    %v75 = vld [vmem:[%s1 + $0x68] sm:$0xf]
    %v76 = vld [vmem:[%s1 + $0x6c] sm:$0xf]
    %v77 = vld [vmem:[%s1 + $0x70] sm:$0xf]
    %v78 = vld [vmem:[%s1 + $0x74] sm:$0xf]
    %v79 = vld [vmem:[%s1 + $0x78] sm:$0xf]
    %v80 = vld [vmem:[%s1 + $0x7c] sm:$0xf]
    %v81 = vld [vmem:[%s1 + $0x80] sm:$0xf]
    %v82 = vld [vmem:[%s1 + $0x84] sm:$0xf]
    %v83 = vld [vmem:[%s1 + $0x88] sm:$0xf]
    %v84 = vld [vmem:[%s1 + $0x8c] sm:$0xf]
    %v101 = vunpack.c.l.b16 %v33
    %v102 = vunpack.c.h.b16 %v33
    %v103 = vunpack.c.l.b16 %v34
    %v104 = vunpack.c.l.b16 %v35
    %v105 = vunpack.c.h.b16 %v35
    %v106 = vunpack.c.l.b16 %v36
    %v107 = vunpack.c.l.b16 %v37
    %v108 = vunpack.c.h.b16 %v37
    %v109 = vunpack.c.l.b16 %v38
    %v110 = vunpack.c.l.b16 %v39
    %v111 = vunpack.c.h.b16 %v39
    %v112 = vunpack.c.l.b16 %v40
    %v113 = vunpack.c.l.b16 %v41
    %v114 = vunpack.c.h.b16 %v41
    %v115 = vunpack.c.l.b16 %v42
    %v116 = vunpack.c.l.b16 %v43
    %v117 = vunpack.c.h.b16 %v43
    %v118 = vunpack.c.l.b16 %v44
    %v119 = vunpack.c.l.b16 %v45
    %v120 = vunpack.c.h.b16 %v45
    %v121 = vunpack.c.l.b16 %v46
    %v122 = vunpack.c.l.b16 %v47
    %v123 = vunpack.c.h.b16 %v47
    %v124 = vunpack.c.l.b16 %v48
    %v125 = vpack.c.b16 %v104, %v101
    %v126 = vpack.c.b16 %v105, %v102
    %v127 = vpack.c.b16 %v106, %v103
    %v128 = vpack.c.b16 %v110, %v107
    %v129 = vpack.c.b16 %v111, %v108
    %v130 = vpack.c.b16 %v112, %v109
    %v131 = vpack.c.b16 %v116, %v113
    %v132 = vpack.c.b16 %v117, %v114
    %v133 = vpack.c.b16 %v118, %v115
    %v134 = vpack.c.b16 %v122, %v119
    %v135 = vpack.c.b16 %v123, %v120
    %v136 = vpack.c.b16 %v124, %v121
    %v181 = vunpack.c.l.b16 %v49
    %v182 = vunpack.c.l.b16 %v50
    %v183 = vunpack.c.l.b16 %v51
    %v184 = vunpack.c.l.b16 %v52
    %v185 = vunpack.c.l.b16 %v53
    %v186 = vunpack.c.l.b16 %v54
    %v187 = vunpack.c.l.b16 %v55
    %v188 = vunpack.c.l.b16 %v56
    %v189 = vunpack.c.l.b16 %v57
    %v190 = vunpack.c.l.b16 %v58
    %v191 = vunpack.c.l.b16 %v59
    %v192 = vunpack.c.l.b16 %v60
    %v193 = vunpack.c.l.b16 %v61
    %v194 = vunpack.c.l.b16 %v62
    %v195 = vunpack.c.l.b16 %v63
    %v196 = vunpack.c.l.b16 %v64
    %v197 = vunpack.c.l.b16 %v65
    %v198 = vunpack.c.l.b16 %v66
    %v199 = vunpack.c.l.b16 %v67
    %v200 = vunpack.c.l.b16 %v68
    %v201 = vunpack.c.l.b16 %v69
    %v202 = vunpack.c.l.b16 %v70
    %v203 = vunpack.c.l.b16 %v71
    %v204 = vunpack.c.l.b16 %v72
    %v205 = vunpack.c.l.b16 %v73
    %v206 = vunpack.c.l.b16 %v74
    %v207 = vunpack.c.l.b16 %v75
    %v208 = vunpack.c.l.b16 %v76
    %v209 = vunpack.c.l.b16 %v77
    %v210 = vunpack.c.l.b16 %v78
    %v211 = vunpack.c.l.b16 %v79
    %v212 = vunpack.c.l.b16 %v80
    %v213 = vunpack.c.l.b16 %v81
    %v214 = vunpack.c.l.b16 %v82
    %v215 = vunpack.c.l.b16 %v83
    %v216 = vunpack.c.l.b16 %v84
    %v217 = vpack.c.b16 %v182, %v181
    %v218 = vpack.c.b16 %v184, %v183
    %v219 = vpack.c.b16 %v186, %v185
    %v220 = vpack.c.b16 %v188, %v187
    %v221 = vpack.c.b16 %v190, %v189
    %v222 = vpack.c.b16 %v192, %v191
    %v223 = vpack.c.b16 %v194, %v193
    %v224 = vpack.c.b16 %v196, %v195
    %v225 = vpack.c.b16 %v198, %v197
    %v226 = vpack.c.b16 %v200, %v199
    %v227 = vpack.c.b16 %v202, %v201
    %v228 = vpack.c.b16 %v204, %v203
    %v229 = vpack.c.b16 %v206, %v205
    %v230 = vpack.c.b16 %v208, %v207
    %v231 = vpack.c.b16 %v210, %v209
    %v232 = vpack.c.b16 %v212, %v211
    %v233 = vpack.c.b16 %v214, %v213
    %v234 = vpack.c.b16 %v216, %v215
    %vm253 = vcmask 261120
    %v255 = vsel %vm253, %v127, 0
    %v258 = vsel %vm253, %v130, 0
    %v261 = vsel %vm253, %v133, 0
    %v264 = vsel %vm253, %v136, 0
    %266 = vmatpush.bf16.msra.mxu0 %v224
    %267 = vmatpush.bf16.msra.mxu0 %v223
    %268 = vmatpush.bf16.msra.mxu0 %v222
    %269 = vmatpush.bf16.msra.mxu0 %v221
    %270 = vmatpush.bf16.msra.mxu0 %v220
    %271 = vmatpush.bf16.msra.mxu0 %v219
    %272 = vmatpush.bf16.msra.mxu0 %v218
    %273 = vmatpush.bf16.msra.mxu0 %v217
    %274 = vmatmul.bf16.gmra.mxu0 %v125
    %v275 = vpop.f32.mrf.mxu0
    %v276 = vadd.f32 %v28, %v275
    %v277 = vpop.f32.mrf.mxu0
    %v278 = vadd.f32 %v28, %v277
    %279 = vmatmul.bf16.gmra.mxu0 %v128
    %v280 = vpop.f32.mrf.mxu0
    %v281 = vadd.f32 %v28, %v280
    %v282 = vpop.f32.mrf.mxu0
    %v283 = vadd.f32 %v28, %v282
    %284 = vmatmul.bf16.gmra.mxu0 %v131
    %v285 = vpop.f32.mrf.mxu0
    %v286 = vadd.f32 %v28, %v285
    %v287 = vpop.f32.mrf.mxu0
    %v288 = vadd.f32 %v28, %v287
    %289 = vmatmul.bf16.gmra.mxu0 %v134
    %v290 = vpop.f32.mrf.mxu0
    %v291 = vadd.f32 %v28, %v290
    %v292 = vpop.f32.mrf.mxu0
    %v293 = vadd.f32 %v28, %v292
    %294 = vdwg.mxu0
    %295 = vmatpush.bf16.msra.mxu0 %v232
    %296 = vmatpush.bf16.msra.mxu0 %v231
    %297 = vmatpush.bf16.msra.mxu0 %v230
    %298 = vmatpush.bf16.msra.mxu0 %v229
    %299 = vmatpush.bf16.msra.mxu0 %v228
    %300 = vmatpush.bf16.msra.mxu0 %v227
    %301 = vmatpush.bf16.msra.mxu0 %v226
    %302 = vmatpush.bf16.msra.mxu0 %v225
    %303 = vmatmul.bf16.gmra.mxu0 %v126
    %v304 = vpop.f32.mrf.mxu0
    %v305 = vadd.f32 %v276, %v304
    %v306 = vpop.f32.mrf.mxu0
    %v307 = vadd.f32 %v278, %v306
    %308 = vmatmul.bf16.gmra.mxu0 %v129
    %v309 = vpop.f32.mrf.mxu0
    %v310 = vadd.f32 %v281, %v309
    %v311 = vpop.f32.mrf.mxu0
    %v312 = vadd.f32 %v283, %v311
    %313 = vmatmul.bf16.gmra.mxu0 %v132
    %v314 = vpop.f32.mrf.mxu0
    %v315 = vadd.f32 %v286, %v314
    %v316 = vpop.f32.mrf.mxu0
    %v317 = vadd.f32 %v288, %v316
    %318 = vmatmul.bf16.gmra.mxu0 %v135
    %v319 = vpop.f32.mrf.mxu0
    %v320 = vadd.f32 %v291, %v319
    %v321 = vpop.f32.mrf.mxu0
    %v322 = vadd.f32 %v293, %v321
    %323 = vdwg.mxu0
    %324 = vmatpush.bf16.msra.mxu0 0
    %325 = vmatpush.bf16.msra.mxu0 0
    %326 = vmatpush.bf16.msra.mxu0 0
    %327 = vmatpush.bf16.msra.mxu0 0
    %328 = vmatpush.bf16.msra.mxu0 0
    %329 = vmatpush.bf16.msra.mxu0 0
    %330 = vmatpush.bf16.msra.mxu0 %v234
    %331 = vmatpush.bf16.msra.mxu0 %v233
    %332 = vmatmul.bf16.gmra.mxu0 %v255
    %v333 = vpop.f32.mrf.mxu0
    %v334 = vadd.f32 %v305, %v333
    %v335 = vpop.f32.mrf.mxu0
    %v336 = vadd.f32 %v307, %v335
    %337 = vmatmul.bf16.gmra.mxu0 %v258
    %v338 = vpop.f32.mrf.mxu0
    %v339 = vadd.f32 %v310, %v338
    %v340 = vpop.f32.mrf.mxu0
    %v341 = vadd.f32 %v312, %v340
    %342 = vmatmul.bf16.gmra.mxu0 %v261
    %v343 = vpop.f32.mrf.mxu0
    %v344 = vadd.f32 %v315, %v343
    %v345 = vpop.f32.mrf.mxu0
    %v346 = vadd.f32 %v317, %v345
    %347 = vmatmul.bf16.gmra.mxu0 %v264
    %v348 = vpop.f32.mrf.mxu0
    %v349 = vadd.f32 %v320, %v348
    %v350 = vpop.f32.mrf.mxu0
    %v351 = vadd.f32 %v322, %v350
    %352 = vdwg.mxu0
    %v353 = vmax.f32 %v334, 0.0
    %v354 = vmax.f32 %v336, 0.0
    %v355 = vmax.f32 %v339, 0.0
    %v356 = vmax.f32 %v341, 0.0
    %v357 = vmax.f32 %v344, 0.0
    %v358 = vmax.f32 %v346, 0.0
    %v359 = vmax.f32 %v349, 0.0
    %v360 = vmax.f32 %v351, 0.0
    %v361 = vld [vmem:[%s2] sm:$0x1]
    %v362 = vpack.c.bf16 %v354, %v353
    %v363 = vpack.c.bf16 %v356, %v355
    %v364 = vpack.c.bf16 %v358, %v357
    %v365 = vpack.c.bf16 %v360, %v359
    %vm366 = vcmask 523264
    %v368 = vsel %vm366, %v361, 0
    %370 = vmatpush.bf16.msra.mxu0 0
    %371 = vmatpush.bf16.msra.mxu0 0
    %372 = vmatpush.bf16.msra.mxu0 0
    %373 = vmatpush.bf16.msra.mxu0 0
    %374 = vmatpush.bf16.msra.mxu0 %v365
    %375 = vmatpush.bf16.msra.mxu0 %v364
    %376 = vmatpush.bf16.msra.mxu0 %v363
    %377 = vmatpush.bf16.msra.mxu0 %v362
    %378 = vmatmul.bf16.gmra.mxu0 %v368
    %v379 = vpop.f32.mrf.mxu0
    %v380 = vadd.f32 0.0, %v379
    %v381 = vpop.f32.mrf.mxu0
    %382 = vdwg.mxu0
    %v383 = vpack.c.bf16 %v380, %v380
    %v384 = vld [vmem:[%s3] sm:$0xff]
    %v385 = vld [vmem:[%s3 + $0x8] sm:$0xff]
    %v386 = vld [vmem:[%s3 + $0x10] sm:$0xff]
    %v387 = vld [vmem:[%s3 + $0x18] sm:$0xff]
    %v388 = vld [vmem:[%s3 + $0x20] sm:$0xff]
    %v389 = vld [vmem:[%s3 + $0x28] sm:$0xff]
    %v390 = vld [vmem:[%s3 + $0x30] sm:$0xff]
    %v391 = vld [vmem:[%s3 + $0x38] sm:$0xff]
    %v392 = vld [vmem:[%s3 + $0x40] sm:$0xff]
    %v393 = vld [vmem:[%s3 + $0x48] sm:$0xff]
    %v394 = vld [vmem:[%s3 + $0x50] sm:$0xff]
    %v395 = vld [vmem:[%s3 + $0x58] sm:$0xff]
    %v396 = vld [vmem:[%s3 + $0x60] sm:$0xff]
    %v397 = vld [vmem:[%s3 + $0x68] sm:$0xff]
    %v398 = vld [vmem:[%s3 + $0x70] sm:$0xff]
    %v399 = vld [vmem:[%s3 + $0x78] sm:$0xff]
    %v400 = vld [vmem:[%s3 + $0x80] sm:$0xff]
    %v401 = vld [vmem:[%s3 + $0x88] sm:$0xff]
    %v402 = vld [vmem:[%s3 + $0x90] sm:$0xff]
    %v403 = vld [vmem:[%s3 + $0x98] sm:$0xff]
    %v404 = vld [vmem:[%s3 + $0xa0] sm:$0xff]
    %v405 = vld [vmem:[%s3 + $0xa8] sm:$0xff]
    %v406 = vld [vmem:[%s3 + $0xb0] sm:$0xff]
    %v407 = vld [vmem:[%s3 + $0xb8] sm:$0xff]
    %v408 = vld [vmem:[%s3 + $0xc0] sm:$0xff]
    %v409 = vld [vmem:[%s3 + $0xc8] sm:$0xff]
    %v410 = vld [vmem:[%s3 + $0xd0] sm:$0xff]
    %v411 = vld [vmem:[%s3 + $0xd8] sm:$0xff]
    %v412 = vld [vmem:[%s3 + $0xe0] sm:$0xff]
    %v413 = vld [vmem:[%s3 + $0xe8] sm:$0xff]
    %v414 = vld [vmem:[%s3 + $0xf0] sm:$0xff]
    %v415 = vld [vmem:[%s3 + $0xf8] sm:$0xff]
    %v417 = vperm.slane %v30, 0
    %v418 = vperm.slane %v30, 1
    %v419 = vperm.slane %v30, 2
    %v420 = vperm.slane %v30, 3
    %v457 = vunpack.c.l.b16 %v384
    %v458 = vunpack.c.h.b16 %v384
    %v459 = vunpack.c.l.b16 %v385
    %v460 = vunpack.c.h.b16 %v385
    %v461 = vunpack.c.l.b16 %v386
    %v462 = vunpack.c.h.b16 %v386
    %v463 = vunpack.c.l.b16 %v387
    %v464 = vunpack.c.h.b16 %v387
    %v465 = vunpack.c.l.b16 %v388
    %v466 = vunpack.c.h.b16 %v388
    %v467 = vunpack.c.l.b16 %v389
    %v468 = vunpack.c.h.b16 %v389
    %v469 = vunpack.c.l.b16 %v390
    %v470 = vunpack.c.h.b16 %v390
    %v471 = vunpack.c.l.b16 %v391
    %v472 = vunpack.c.h.b16 %v391
    %v473 = vunpack.c.l.b16 %v392
    %v474 = vunpack.c.h.b16 %v392
    %v475 = vunpack.c.l.b16 %v393
    %v476 = vunpack.c.h.b16 %v393
    %v477 = vunpack.c.l.b16 %v394
    %v478 = vunpack.c.h.b16 %v394
    %v479 = vunpack.c.l.b16 %v395
    %v480 = vunpack.c.h.b16 %v395
    %v481 = vunpack.c.l.b16 %v396
    %v482 = vunpack.c.h.b16 %v396
    %v483 = vunpack.c.l.b16 %v397
    %v484 = vunpack.c.h.b16 %v397
    %v485 = vunpack.c.l.b16 %v398
    %v486 = vunpack.c.h.b16 %v398
    %v487 = vunpack.c.l.b16 %v399
    %v488 = vunpack.c.h.b16 %v399
    %v489 = vunpack.c.l.b16 %v400
    %v490 = vunpack.c.h.b16 %v400
    %v491 = vunpack.c.l.b16 %v401
    %v492 = vunpack.c.h.b16 %v401
    %v493 = vunpack.c.l.b16 %v402
    %v494 = vunpack.c.h.b16 %v402
    %v495 = vunpack.c.l.b16 %v403
    %v496 = vunpack.c.h.b16 %v403
    %v497 = vunpack.c.l.b16 %v404
    %v498 = vunpack.c.h.b16 %v404
    %v499 = vunpack.c.l.b16 %v405
    %v500 = vunpack.c.h.b16 %v405
    %v501 = vunpack.c.l.b16 %v406
    %v502 = vunpack.c.h.b16 %v406
    %v503 = vunpack.c.l.b16 %v407
    %v504 = vunpack.c.h.b16 %v407
    %v505 = vunpack.c.l.b16 %v408
    %v506 = vunpack.c.h.b16 %v408
    %v507 = vunpack.c.l.b16 %v409
    %v508 = vunpack.c.h.b16 %v409
    %v509 = vunpack.c.l.b16 %v410
    %v510 = vunpack.c.h.b16 %v410
    %v511 = vunpack.c.l.b16 %v411
    %v512 = vunpack.c.h.b16 %v411
    %v513 = vunpack.c.l.b16 %v412
    %v514 = vunpack.c.h.b16 %v412
    %v515 = vunpack.c.l.b16 %v413
    %v516 = vunpack.c.h.b16 %v413
    %v517 = vunpack.c.l.b16 %v414
    %v518 = vunpack.c.h.b16 %v414
    %v519 = vunpack.c.l.b16 %v415
    %v520 = vunpack.c.h.b16 %v415
    %v521 = vpack.c.b16 %v461, %v457
    %v522 = vpack.c.b16 %v462, %v458
    %v523 = vpack.c.b16 %v463, %v459
    %v524 = vpack.c.b16 %v464, %v460
    %v525 = vpack.c.b16 %v469, %v465
    %v526 = vpack.c.b16 %v470, %v466
    %v527 = vpack.c.b16 %v471, %v467
    %v528 = vpack.c.b16 %v472, %v468
    %v529 = vpack.c.b16 %v477, %v473
    %v530 = vpack.c.b16 %v478, %v474
    %v531 = vpack.c.b16 %v479, %v475
    %v532 = vpack.c.b16 %v480, %v476
    %v533 = vpack.c.b16 %v485, %v481
    %v534 = vpack.c.b16 %v486, %v482
    %v535 = vpack.c.b16 %v487, %v483
    %v536 = vpack.c.b16 %v488, %v484
    %v537 = vpack.c.b16 %v493, %v489
    %v538 = vpack.c.b16 %v494, %v490
    %v539 = vpack.c.b16 %v495, %v491
    %v540 = vpack.c.b16 %v496, %v492
    %v541 = vpack.c.b16 %v501, %v497
    %v542 = vpack.c.b16 %v502, %v498
    %v543 = vpack.c.b16 %v503, %v499
    %v544 = vpack.c.b16 %v504, %v500
    %v545 = vpack.c.b16 %v509, %v505
    %v546 = vpack.c.b16 %v510, %v506
    %v547 = vpack.c.b16 %v511, %v507
    %v548 = vpack.c.b16 %v512, %v508
    %v549 = vpack.c.b16 %v517, %v513
    %v550 = vpack.c.b16 %v518, %v514
    %v551 = vpack.c.b16 %v519, %v515
    %v552 = vpack.c.b16 %v520, %v516
    %585 = vmatpush.bf16.msra.mxu0 %v549
    %586 = vmatpush.bf16.msra.mxu0 %v545
    %587 = vmatpush.bf16.msra.mxu0 %v541
    %588 = vmatpush.bf16.msra.mxu0 %v537
    %589 = vmatpush.bf16.msra.mxu0 %v533
    %590 = vmatpush.bf16.msra.mxu0 %v529
    %591 = vmatpush.bf16.msra.mxu0 %v525
    %592 = vmatpush.bf16.msra.mxu0 %v521
    %593 = vmatmul.bf16.gmra.mxu0 %v383
    %v594 = vpop.f32.mrf.mxu0
    %v595 = vadd.f32 %v417, %v594
    %v596 = vpop.f32.mrf.mxu0
    %597 = vdwg.mxu0
    %598 = vmatpush.bf16.msra.mxu0 %v550
    %599 = vmatpush.bf16.msra.mxu0 %v546
    %600 = vmatpush.bf16.msra.mxu0 %v542
    %601 = vmatpush.bf16.msra.mxu0 %v538
    %602 = vmatpush.bf16.msra.mxu0 %v534
    %603 = vmatpush.bf16.msra.mxu0 %v530
    %604 = vmatpush.bf16.msra.mxu0 %v526
    %605 = vmatpush.bf16.msra.mxu0 %v522
    %606 = vmatmul.bf16.gmra.mxu0 %v383
    %v607 = vpop.f32.mrf.mxu0
    %v608 = vadd.f32 %v418, %v607
    %v609 = vpop.f32.mrf.mxu0
    %610 = vdwg.mxu0
    %611 = vmatpush.bf16.msra.mxu0 %v551
    %612 = vmatpush.bf16.msra.mxu0 %v547
    %613 = vmatpush.bf16.msra.mxu0 %v543
    %614 = vmatpush.bf16.msra.mxu0 %v539
    %615 = vmatpush.bf16.msra.mxu0 %v535
    %616 = vmatpush.bf16.msra.mxu0 %v531
    %617 = vmatpush.bf16.msra.mxu0 %v527
    %618 = vmatpush.bf16.msra.mxu0 %v523
    %619 = vmatmul.bf16.gmra.mxu0 %v383
    %v620 = vpop.f32.mrf.mxu0
    %v621 = vadd.f32 %v419, %v620
    %v622 = vpop.f32.mrf.mxu0
    %623 = vdwg.mxu0
    %624 = vmatpush.bf16.msra.mxu0 %v552
    %625 = vmatpush.bf16.msra.mxu0 %v548
    %626 = vmatpush.bf16.msra.mxu0 %v544
    %627 = vmatpush.bf16.msra.mxu0 %v540
    %628 = vmatpush.bf16.msra.mxu0 %v536
    %629 = vmatpush.bf16.msra.mxu0 %v532
    %630 = vmatpush.bf16.msra.mxu0 %v528
    %631 = vmatpush.bf16.msra.mxu0 %v524
    %632 = vmatmul.bf16.gmra.mxu0 %v383
    %v633 = vpop.f32.mrf.mxu0
    %v634 = vadd.f32 %v420, %v633
    %v635 = vpop.f32.mrf.mxu0
    %636 = vdwg.mxu0
    %v637 = vmax.f32 %v595, 0.0
    %v638 = vmax.f32 %v608, 0.0
    %v639 = vmax.f32 %v621, 0.0
    %v640 = vmax.f32 %v634, 0.0
    %v641 = vpack.c.bf16 %v637, %v637
    %v642 = vpack.c.bf16 %v638, %v638
    %v643 = vpack.c.bf16 %v639, %v639
    %v644 = vpack.c.bf16 %v640, %v640
    %v645 = vld [vmem:[%s4] sm:$0xf]
    %v646 = vld [vmem:[%s4 + $0x4] sm:$0xf]
    %v647 = vld [vmem:[%s4 + $0x8] sm:$0xf]
    %v648 = vld [vmem:[%s4 + $0xc] sm:$0xf]
    %v649 = vld [vmem:[%s4 + $0x10] sm:$0xf]
    %v650 = vld [vmem:[%s4 + $0x14] sm:$0xf]
    %v651 = vld [vmem:[%s4 + $0x18] sm:$0xf]
    %v652 = vld [vmem:[%s4 + $0x1c] sm:$0xf]
    %v653 = vld [vmem:[%s4 + $0x20] sm:$0xf]
    %v654 = vld [vmem:[%s4 + $0x24] sm:$0xf]
    %v655 = vld [vmem:[%s4 + $0x28] sm:$0xf]
    %v656 = vld [vmem:[%s4 + $0x2c] sm:$0xf]
    %v657 = vld [vmem:[%s4 + $0x30] sm:$0xf]
    %v658 = vld [vmem:[%s4 + $0x34] sm:$0xf]
    %v659 = vld [vmem:[%s4 + $0x38] sm:$0xf]
    %v660 = vld [vmem:[%s4 + $0x3c] sm:$0xf]
    %v661 = vld [vmem:[%s4 + $0x40] sm:$0xf]
    %v662 = vld [vmem:[%s4 + $0x44] sm:$0xf]
    %v663 = vld [vmem:[%s4 + $0x48] sm:$0xf]
    %v664 = vld [vmem:[%s4 + $0x4c] sm:$0xf]
    %v665 = vld [vmem:[%s4 + $0x50] sm:$0xf]
    %v666 = vld [vmem:[%s4 + $0x54] sm:$0xf]
    %v667 = vld [vmem:[%s4 + $0x58] sm:$0xf]
    %v668 = vld [vmem:[%s4 + $0x5c] sm:$0xf]
    %v669 = vld [vmem:[%s4 + $0x60] sm:$0xf]
    %v670 = vld [vmem:[%s4 + $0x64] sm:$0xf]
    %v671 = vld [vmem:[%s4 + $0x68] sm:$0xf]
    %v672 = vld [vmem:[%s4 + $0x6c] sm:$0xf]
    %v673 = vld [vmem:[%s4 + $0x70] sm:$0xf]
    %v674 = vld [vmem:[%s4 + $0x74] sm:$0xf]
    %v675 = vld [vmem:[%s4 + $0x78] sm:$0xf]
    %v676 = vld [vmem:[%s4 + $0x7c] sm:$0xf]
    %v677 = vld [vmem:[%s4 + $0x80] sm:$0xf]
    %v678 = vld [vmem:[%s4 + $0x84] sm:$0xf]
    %v679 = vld [vmem:[%s4 + $0x88] sm:$0xf]
    %v680 = vld [vmem:[%s4 + $0x8c] sm:$0xf]
    %v681 = vld [vmem:[%s4 + $0x90] sm:$0xf]
    %v682 = vld [vmem:[%s4 + $0x94] sm:$0xf]
    %v683 = vld [vmem:[%s4 + $0x98] sm:$0xf]
    %v684 = vld [vmem:[%s4 + $0x9c] sm:$0xf]
    %v685 = vld [vmem:[%s4 + $0xa0] sm:$0xf]
    %v686 = vld [vmem:[%s4 + $0xa4] sm:$0xf]
    %v687 = vld [vmem:[%s4 + $0xa8] sm:$0xf]
    %v688 = vld [vmem:[%s4 + $0xac] sm:$0xf]
    %v689 = vld [vmem:[%s4 + $0xb0] sm:$0xf]
    %v690 = vld [vmem:[%s4 + $0xb4] sm:$0xf]
    %v691 = vld [vmem:[%s4 + $0xb8] sm:$0xf]
    %v692 = vld [vmem:[%s4 + $0xbc] sm:$0xf]
    %v693 = vld [vmem:[%s4 + $0xc0] sm:$0xf]
    %v694 = vld [vmem:[%s4 + $0xc4] sm:$0xf]
    %v695 = vld [vmem:[%s4 + $0xc8] sm:$0xf]
    %v696 = vld [vmem:[%s4 + $0xcc] sm:$0xf]
    %v697 = vld [vmem:[%s4 + $0xd0] sm:$0xf]
    %v698 = vld [vmem:[%s4 + $0xd4] sm:$0xf]
    %v699 = vld [vmem:[%s4 + $0xd8] sm:$0xf]
    %v700 = vld [vmem:[%s4 + $0xdc] sm:$0xf]
    %v701 = vld [vmem:[%s4 + $0xe0] sm:$0xf]
    %v702 = vld [vmem:[%s4 + $0xe4] sm:$0xf]
    %v703 = vld [vmem:[%s4 + $0xe8] sm:$0xf]
    %v704 = vld [vmem:[%s4 + $0xec] sm:$0xf]
    %v705 = vld [vmem:[%s4 + $0xf0] sm:$0xf]
    %v706 = vld [vmem:[%s4 + $0xf4] sm:$0xf]
    %v707 = vld [vmem:[%s4 + $0xf8] sm:$0xf]
    %v708 = vld [vmem:[%s4 + $0xfc] sm:$0xf]
    %v773 = vunpack.c.l.b16 %v645
    %v774 = vunpack.c.l.b16 %v646
    %v775 = vunpack.c.l.b16 %v647
    %v776 = vunpack.c.l.b16 %v648
    %v777 = vunpack.c.l.b16 %v649
    %v778 = vunpack.c.l.b16 %v650
    %v779 = vunpack.c.l.b16 %v651
    %v780 = vunpack.c.l.b16 %v652
    %v781 = vunpack.c.l.b16 %v653
    %v782 = vunpack.c.l.b16 %v654
    %v783 = vunpack.c.l.b16 %v655
    %v784 = vunpack.c.l.b16 %v656
    %v785 = vunpack.c.l.b16 %v657
    %v786 = vunpack.c.l.b16 %v658
    %v787 = vunpack.c.l.b16 %v659
    %v788 = vunpack.c.l.b16 %v660
    %v789 = vunpack.c.l.b16 %v661
    %v790 = vunpack.c.l.b16 %v662
    %v791 = vunpack.c.l.b16 %v663
    %v792 = vunpack.c.l.b16 %v664
    %v793 = vunpack.c.l.b16 %v665
    %v794 = vunpack.c.l.b16 %v666
    %v795 = vunpack.c.l.b16 %v667
    %v796 = vunpack.c.l.b16 %v668
    %v797 = vunpack.c.l.b16 %v669
    %v798 = vunpack.c.l.b16 %v670
    %v799 = vunpack.c.l.b16 %v671
    %v800 = vunpack.c.l.b16 %v672
    %v801 = vunpack.c.l.b16 %v673
    %v802 = vunpack.c.l.b16 %v674
    %v803 = vunpack.c.l.b16 %v675
    %v804 = vunpack.c.l.b16 %v676
    %v805 = vunpack.c.l.b16 %v677
    %v806 = vunpack.c.l.b16 %v678
    %v807 = vunpack.c.l.b16 %v679
    %v808 = vunpack.c.l.b16 %v680
    %v809 = vunpack.c.l.b16 %v681
    %v810 = vunpack.c.l.b16 %v682
    %v811 = vunpack.c.l.b16 %v683
    %v812 = vunpack.c.l.b16 %v684
    %v813 = vunpack.c.l.b16 %v685
    %v814 = vunpack.c.l.b16 %v686
    %v815 = vunpack.c.l.b16 %v687
    %v816 = vunpack.c.l.b16 %v688
    %v817 = vunpack.c.l.b16 %v689
    %v818 = vunpack.c.l.b16 %v690
    %v819 = vunpack.c.l.b16 %v691
    %v820 = vunpack.c.l.b16 %v692
    %v821 = vunpack.c.l.b16 %v693
    %v822 = vunpack.c.l.b16 %v694
    %v823 = vunpack.c.l.b16 %v695
    %v824 = vunpack.c.l.b16 %v696
    %v825 = vunpack.c.l.b16 %v697
    %v826 = vunpack.c.l.b16 %v698
    %v827 = vunpack.c.l.b16 %v699
    %v828 = vunpack.c.l.b16 %v700
    %v829 = vunpack.c.l.b16 %v701
    %v830 = vunpack.c.l.b16 %v702
    %v831 = vunpack.c.l.b16 %v703
    %v832 = vunpack.c.l.b16 %v704
    %v833 = vunpack.c.l.b16 %v705
    %v834 = vunpack.c.l.b16 %v706
    %v835 = vunpack.c.l.b16 %v707
    %v836 = vunpack.c.l.b16 %v708
    %v837 = vpack.c.b16 %v774, %v773
    %v838 = vpack.c.b16 %v776, %v775
    %v839 = vpack.c.b16 %v778, %v777
    %v840 = vpack.c.b16 %v780, %v779
    %v841 = vpack.c.b16 %v782, %v781
    %v842 = vpack.c.b16 %v784, %v783
    %v843 = vpack.c.b16 %v786, %v785
    %v844 = vpack.c.b16 %v788, %v787
    %v845 = vpack.c.b16 %v790, %v789
    %v846 = vpack.c.b16 %v792, %v791
    %v847 = vpack.c.b16 %v794, %v793
    %v848 = vpack.c.b16 %v796, %v795
    %v849 = vpack.c.b16 %v798, %v797
    %v850 = vpack.c.b16 %v800, %v799
    %v851 = vpack.c.b16 %v802, %v801
    %v852 = vpack.c.b16 %v804, %v803
    %v853 = vpack.c.b16 %v806, %v805
    %v854 = vpack.c.b16 %v808, %v807
    %v855 = vpack.c.b16 %v810, %v809
    %v856 = vpack.c.b16 %v812, %v811
    %v857 = vpack.c.b16 %v814, %v813
    %v858 = vpack.c.b16 %v816, %v815
    %v859 = vpack.c.b16 %v818, %v817
    %v860 = vpack.c.b16 %v820, %v819
    %v861 = vpack.c.b16 %v822, %v821
    %v862 = vpack.c.b16 %v824, %v823
    %v863 = vpack.c.b16 %v826, %v825
    %v864 = vpack.c.b16 %v828, %v827
    %v865 = vpack.c.b16 %v830, %v829
    %v866 = vpack.c.b16 %v832, %v831
    %v867 = vpack.c.b16 %v834, %v833
    %v868 = vpack.c.b16 %v836, %v835
    %901 = vmatpush.bf16.msra.mxu0 %v844
    %902 = vmatpush.bf16.msra.mxu0 %v843
    %903 = vmatpush.bf16.msra.mxu0 %v842
    %904 = vmatpush.bf16.msra.mxu0 %v841
    %905 = vmatpush.bf16.msra.mxu0 %v840
    %906 = vmatpush.bf16.msra.mxu0 %v839
    %907 = vmatpush.bf16.msra.mxu0 %v838
    %908 = vmatpush.bf16.msra.mxu0 %v837
    %909 = vmatmul.bf16.gmra.mxu0 %v641
    %v910 = vpop.f32.mrf.mxu0
    %v911 = vadd.f32 %v31, %v910
    %v912 = vpop.f32.mrf.mxu0
    %913 = vdwg.mxu0
    %914 = vmatpush.bf16.msra.mxu0 %v852
    %915 = vmatpush.bf16.msra.mxu0 %v851
    %916 = vmatpush.bf16.msra.mxu0 %v850
    %917 = vmatpush.bf16.msra.mxu0 %v849
    %918 = vmatpush.bf16.msra.mxu0 %v848
    %919 = vmatpush.bf16.msra.mxu0 %v847
    %920 = vmatpush.bf16.msra.mxu0 %v846
    %921 = vmatpush.bf16.msra.mxu0 %v845
    %922 = vmatmul.bf16.gmra.mxu0 %v642
    %v923 = vpop.f32.mrf.mxu0
    %v924 = vadd.f32 %v911, %v923
    %v925 = vpop.f32.mrf.mxu0
    %926 = vdwg.mxu0
    %927 = vmatpush.bf16.msra.mxu0 %v860
    %928 = vmatpush.bf16.msra.mxu0 %v859
    %929 = vmatpush.bf16.msra.mxu0 %v858
    %930 = vmatpush.bf16.msra.mxu0 %v857
    %931 = vmatpush.bf16.msra.mxu0 %v856
    %932 = vmatpush.bf16.msra.mxu0 %v855
    %933 = vmatpush.bf16.msra.mxu0 %v854
    %934 = vmatpush.bf16.msra.mxu0 %v853
    %935 = vmatmul.bf16.gmra.mxu0 %v643
    %v936 = vpop.f32.mrf.mxu0
    %v937 = vadd.f32 %v924, %v936
    %v938 = vpop.f32.mrf.mxu0
    %939 = vdwg.mxu0
    %940 = vmatpush.bf16.msra.mxu0 %v868
    %941 = vmatpush.bf16.msra.mxu0 %v867
    %942 = vmatpush.bf16.msra.mxu0 %v866
    %943 = vmatpush.bf16.msra.mxu0 %v865
    %944 = vmatpush.bf16.msra.mxu0 %v864
    %945 = vmatpush.bf16.msra.mxu0 %v863
    %946 = vmatpush.bf16.msra.mxu0 %v862
    %947 = vmatpush.bf16.msra.mxu0 %v861
    %948 = vmatmul.bf16.gmra.mxu0 %v644
    %v949 = vpop.f32.mrf.mxu0
    %v950 = vadd.f32 %v937, %v949
    %v951 = vpop.f32.mrf.mxu0
    %952 = vdwg.mxu0
    %v953 = vmax.f32 %v950, 0.0
    %v954 = vpack.c.bf16 %v953, %v953
    %v955 = vld [vmem:[%s5] sm:$0xf]
    %v956 = vld [vmem:[%s5 + $0x4] sm:$0xf]
    %v957 = vld [vmem:[%s5 + $0x8] sm:$0xf]
    %v958 = vld [vmem:[%s5 + $0xc] sm:$0xf]
    %v959 = vld [vmem:[%s5 + $0x10] sm:$0xf]
    %v960 = vld [vmem:[%s5 + $0x14] sm:$0xf]
    %v961 = vld [vmem:[%s5 + $0x18] sm:$0xf]
    %v962 = vld [vmem:[%s5 + $0x1c] sm:$0xf]
    %v963 = vld [vmem:[%s5 + $0x20] sm:$0xf]
    %v964 = vld [vmem:[%s5 + $0x24] sm:$0xf]
    %v965 = vld [vmem:[%s5 + $0x28] sm:$0xf]
    %v966 = vld [vmem:[%s5 + $0x2c] sm:$0xf]
    %v967 = vld [vmem:[%s5 + $0x30] sm:$0xf]
    %v968 = vld [vmem:[%s5 + $0x34] sm:$0xf]
    %v969 = vld [vmem:[%s5 + $0x38] sm:$0xf]
    %v970 = vld [vmem:[%s5 + $0x3c] sm:$0xf]
    %v987 = vunpack.c.l.b16 %v955
    %v988 = vunpack.c.l.b16 %v956
    %v989 = vunpack.c.l.b16 %v957
    %v990 = vunpack.c.l.b16 %v958
    %v991 = vunpack.c.l.b16 %v959
    %v992 = vunpack.c.l.b16 %v960
    %v993 = vunpack.c.l.b16 %v961
    %v994 = vunpack.c.l.b16 %v962
    %v995 = vunpack.c.l.b16 %v963
    %v996 = vunpack.c.l.b16 %v964
    %v997 = vunpack.c.l.b16 %v965
    %v998 = vunpack.c.l.b16 %v966
    %v999 = vunpack.c.l.b16 %v967
    %v1000 = vunpack.c.l.b16 %v968
    %v1001 = vunpack.c.l.b16 %v969
    %v1002 = vunpack.c.l.b16 %v970
    %v1003 = vpack.c.b16 %v988, %v987
    %v1004 = vpack.c.b16 %v990, %v989
    %v1005 = vpack.c.b16 %v992, %v991
    %v1006 = vpack.c.b16 %v994, %v993
    %v1007 = vpack.c.b16 %v996, %v995
    %v1008 = vpack.c.b16 %v998, %v997
    %v1009 = vpack.c.b16 %v1000, %v999
    %v1010 = vpack.c.b16 %v1002, %v1001
    %1019 = vmatpush.bf16.msra.mxu0 %v1010
    %1020 = vmatpush.bf16.msra.mxu0 %v1009
    %1021 = vmatpush.bf16.msra.mxu0 %v1008
    %1022 = vmatpush.bf16.msra.mxu0 %v1007
    %1023 = vmatpush.bf16.msra.mxu0 %v1006
    %1024 = vmatpush.bf16.msra.mxu0 %v1005
    %1025 = vmatpush.bf16.msra.mxu0 %v1004
    %1026 = vmatpush.bf16.msra.mxu0 %v1003
    %1027 = vmatmul.bf16.gmra.mxu0 %v954
    %v1028 = vpop.f32.mrf.mxu0
    %v1029 = vadd.f32 %v32, %v1028
    %v1030 = vpop.f32.mrf.mxu0
    %1031 = vdwg.mxu0
    %1032 = vst [vmem:[#allocation2] sm:$0x3] %v1029
    // Predicated region
    $region30: #{enc_classifier_forward.1} parent=1 // pred_check
      _
    $region31: #{enc_classifier_forward.1} parent=1 // pred_check_branch
      %1034 = sbr.rel (0) target = $region33
    $region32: #{enc_classifier_forward.1} parent=1 // pred_region
      %1036 = vsyncadd [#allocation3], 0
      %s1038 = sshll.u32 [#allocation2], 4
      %s1039 = int_to_ptr.vmem [resolvable:$true] %s1038
      %s1040 = sshll.u32 %s7, 4
      %s1041 = int_to_ptr.hbm [resolvable:$true] %s1040
      %1043 = dma.vmem_to_hbm [thread:$0]  %s1039, 32, %s1041, [#allocation3]
    $region33: #{enc_classifier_forward.1} parent=1 // pred_fallthru
      _
    // Predicated region
    $region34: #{enc_classifier_forward.1} parent=1 // pred_check
      _
    $region35: #{enc_classifier_forward.1} parent=1 // pred_check_branch
      %1045 = sbr.rel (0) target = $region37
    $region36: #{enc_classifier_forward.1} parent=1 // pred_region
      %1047 = dma.done [#allocation3], 32
    $region37: #{enc_classifier_forward.1} parent=1 // pred_fallthru
      _
    %1048 = vsyncpa [#allocation3], 1

</llo_original>
